<compile_context>
chip_gen: v6e
topology: v6e:2x2x1
jax: 0.10.0
libtpu: 0.0.40
codegen_flags: <defaults>
</compile_context>

<pallas_src>
import math
import functools

import jax
import jax.numpy as jnp
from jax import lax
from jax.experimental import pallas as pl
from jax.experimental.pallas import tpu as pltpu


def _round_up(x, m):
    return (x + m - 1) // m * m


def _pick_tile(n_tok, d_pad, itemsize, max_tile, budget_bytes):
    """Token tile sized from a VMEM byte budget (the output block is
    double-buffered by the auto-pipeline), rounded to a multiple of 16 so the
    2-chunk / 8-wide-unroll structure in the gather kernel divides evenly."""
    per_row = d_pad * itemsize
    t = budget_bytes // (2 * per_row)          # 2x: double-buffered out block
    t = min(int(t), int(max_tile), _round_up(n_tok, 16))
    t = max(16, (t // 16) * 16)
    return t


def prepare_embedding_table(table, *, prescale=True):
    """Init-time preparation (call ONCE, not per forward):
      - pads the feature dim to a multiple of 128 (lane-dense output stores)
      - optionally folds sqrt(embed_dim) into the table so the forward pass
        is a pure gather.
    Returns (prepared_table, embed_dim, scale_for_forward)."""
    vocab, embed_dim = table.shape
    d_pad = _round_up(embed_dim, 128)
    t = table
    if prescale:
        t = t * jnp.asarray(math.sqrt(embed_dim), dtype=table.dtype)
    if d_pad != embed_dim:
        t = jnp.pad(t, ((0, 0), (0, d_pad - embed_dim)))
    return t, embed_dim, (1.0 if prescale else float(math.sqrt(embed_dim)))


def _embed_gather_kernel(ids_ref, table_ref, out_ref, sem_ref, *,
                         tile, n_chunks, unroll, scale):
    """HBM-resident table; per-token row-gather DMAs straight into out_ref.

    ids_ref   : SMEM int32 (n_tok_pad,)   -- scalar-prefetched token ids
    table_ref : HBM  (vocab, d_pad)       -- memory_space=pl.ANY (no auto-DMA)
    out_ref   : VMEM (tile, d_pad)        -- output block; gather lands here
    sem_ref   : DMA semaphores (n_chunks,)
    """
    step = pl.program_id(0)
    base = pl.multiple_of(step * tile, tile)
    chunk = tile // n_chunks

    # Phase 1: issue every row-gather DMA up front (all chunks) so they all
    # overlap in flight.  Unrolled by `unroll` so consecutive SMEM id loads /
    # address calcs / descriptor writes co-issue across both scalar slots and
    # the misc slot (the issue phase is the binding scalar work here).
    for c in range(n_chunks):                       # static
        start = c * chunk
        sem = sem_ref.at[c]

        def issue_body(j, carry, start=start, sem=sem):
            t0 = start + j * unroll
            for u in range(unroll):                 # static -> ILP across starts
                t = t0 + u
                row = ids_ref[base + t]
                pltpu.make_async_copy(
                    table_ref.at[pl.ds(row, 1), :],
                    out_ref.at[pl.ds(t, 1), :],
                    sem,
                ).start()
            return carry

        lax.fori_loop(0, chunk // unroll, issue_body, 0)

    # Phase 2: per chunk, ONE byte-counted wait (DMA semaphores count bytes,
    # so one (chunk, d_pad) descriptor equals the sum of the `chunk` row
    # copies issued on that semaphore), then scale that chunk in place while
    # the next chunk's DMAs are still landing.
    for c in range(n_chunks):                       # static
        lo = c * chunk
        view = out_ref.at[pl.ds(lo, chunk), :]
        pltpu.make_async_copy(view, view, sem_ref.at[c]).wait()
        out_ref[pl.ds(lo, chunk), :] = (
            out_ref[pl.ds(lo, chunk), :].astype(jnp.float32) * scale
        ).astype(out_ref.dtype)


def _embed_onehot_kernel(ids_ref, table_ref, out_ref, *, scale, precision):
    """VMEM-resident table; gather as a one-hot matmul on the MXU.

    ids_ref   : VMEM int32 (tile, 1)
    table_ref : VMEM (vocab, d_pad)   -- constant-index block, fetched once
    out_ref   : VMEM (tile, d_pad)
    """
    ids = ids_ref[...]                                    # (tile, 1)
    tile_rows = ids.shape[0]
    vocab = table_ref.shape[0]
    onehot = (ids == lax.broadcasted_iota(jnp.int32, (tile_rows, vocab), 1))
    onehot = onehot.astype(table_ref.dtype)               # (tile, vocab)
    gathered = jnp.dot(onehot, table_ref[...],
                       preferred_element_type=jnp.float32,
                       precision=precision)
    out_ref[...] = (gathered * scale).astype(out_ref.dtype)


def embeddings_forward(ids, table, *, embed_dim=None, scale=None,
                       mode="auto", max_tile=512, vmem_budget_bytes=8 << 20):
    """Embeddings forward: out = table[ids] * scale  (scale defaults to sqrt(d)).

    ids       : int (batch, seq)
    table     : float (vocab, width)  -- width may be pre-padded to 128 lanes
                                         (see prepare_embedding_table)
    embed_dim : logical embedding dim (defaults to table width)
    scale     : pass 1.0 if sqrt(d) was already folded into the table
    mode      : "auto" | "dma" | "onehot"
    """
    batch, seq = ids.shape
    vocab, table_width = table.shape
    if embed_dim is None:
        embed_dim = table_width
    if scale is None:
        scale = math.sqrt(embed_dim)
    scale = float(scale)

    n_tok = batch * seq
    itemsize = jnp.dtype(table.dtype).itemsize

    # Lane-dense layout: feature dim padded to a multiple of 128 so output
    # stores are full-vreg.  If the table width is already a multiple of 128
    # (e.g. prepared once at init), this is free; otherwise it materializes a
    # full table copy each call -> hoist with prepare_embedding_table().
    d_pad = _round_up(table_width, 128)
    table_p = table if d_pad == table_width else jnp.pad(
        table, ((0, 0), (0, d_pad - table_width)))

    if mode == "auto":
        # Small vocab -> one-hot MXU gather with a VMEM-resident table
        # (kept <= 4 MiB so even a double-buffered copy fits v5e's 16 MiB
        # scoped default alongside the output blocks); otherwise HBM gather.
        vocab_limit = 4096 if itemsize <= 2 else 2048
        table_bytes = vocab * d_pad * itemsize
        mode = "onehot" if (vocab <= vocab_limit and table_bytes <= (4 << 20)) else "dma"

    compiler_params = pltpu.CompilerParams(
        dimension_semantics=("parallel",),      # lets v7x split the token grid
        vmem_limit_bytes=32 * 1024 * 1024,      # safe on v5e/v6e/v7x
    )

    # Clamp ids (VMEM/HBM refs have no runtime OOB check) and pad the tail.
    ids_flat = jnp.clip(ids.reshape(n_tok).astype(jnp.int32), 0, vocab - 1)

    if mode == "onehot":
        tile = _pick_tile(n_tok, d_pad, itemsize, min(max_tile, 256), vmem_budget_bytes)
    else:
        tile = _pick_tile(n_tok, d_pad, itemsize, max_tile, vmem_budget_bytes)
    n_tok_pad = _round_up(n_tok, tile)
    n_steps = n_tok_pad // tile
    if n_tok_pad != n_tok:
        ids_flat = jnp.pad(ids_flat, (0, n_tok_pad - n_tok))

    if mode == "onehot":
        precision = (lax.Precision.HIGHEST if itemsize >= 4
                     else lax.Precision.DEFAULT)
        ids_col = ids_flat.reshape(n_tok_pad, 1)
        kernel = functools.partial(_embed_onehot_kernel, scale=scale,
                                   precision=precision)
        # NOTE: the resident-table block could use pipeline_mode=pl.Buffered(1)
        # to avoid a second VMEM copy; the auto-gate keeps it small enough
        # that double buffering is harmless, so we keep the default here.
        out_flat = pl.pallas_call(
            kernel,
            out_shape=jax.ShapeDtypeStruct((n_tok_pad, d_pad), table.dtype),
            grid_spec=pltpu.PrefetchScalarGridSpec(
                num_scalar_prefetch=0,
                grid=(n_steps,),
                in_specs=[
                    pl.BlockSpec((tile, 1), lambda i: (i, 0)),        # ids
                    pl.BlockSpec((vocab, d_pad), lambda i: (0, 0)),   # table (resident)
                ],
                out_specs=pl.BlockSpec((tile, d_pad), lambda i: (i, 0)),
            ),
            compiler_params=compiler_params,
        )(ids_col, table_p)
    else:  # "dma"
        n_chunks = 2        # intra-step overlap: scale chunk 0 while chunk 1 lands
        unroll = 8          # issue-loop unroll width (tile is a multiple of 16)
        kernel = functools.partial(_embed_gather_kernel, tile=tile,
                                   n_chunks=n_chunks, unroll=unroll, scale=scale)
        out_flat = pl.pallas_call(
            kernel,
            out_shape=jax.ShapeDtypeStruct((n_tok_pad, d_pad), table.dtype),
            grid_spec=pltpu.PrefetchScalarGridSpec(
                num_scalar_prefetch=1,                    # ids -> SMEM
                grid=(n_steps,),
                in_specs=[
                    pl.BlockSpec(memory_space=pl.ANY),    # table stays in HBM
                ],
                out_specs=pl.BlockSpec((tile, d_pad), lambda i, ids_sref: (i, 0)),
                scratch_shapes=[
                    pltpu.SemaphoreType.DMA((n_chunks,)),
                ],
            ),
            compiler_params=compiler_params,
        )(ids_flat, table_p)

    return out_flat[:n_tok, :embed_dim].reshape(batch, seq, embed_dim)


if __name__ == "__main__":
    # Deterministic small setup consistent with Embeddings(vocab, embed_dim).
    vocab_length = 64
    embed_dim = 128          # lane-dense feature dim
    batch, seq = 2, 8

    key = jax.random.PRNGKey(0)
    k_tab, k_ids, k_tab2, k_ids2 = jax.random.split(key, 4)

    # nn.Embedding default init is N(0, 1).
    table = jax.random.normal(k_tab, (vocab_length, embed_dim), dtype=jnp.float32)
    ids = jax.random.randint(k_ids, (batch, seq), 0, vocab_length, dtype=jnp.int32)

    ref = jnp.take(table, ids, axis=0) * math.sqrt(embed_dim)

    # Path 1: HBM-resident table, DMA row gather (gather lands in out block).
    out_dma = jax.block_until_ready(embeddings_forward(ids, table, mode="dma"))
    assert out_dma.shape == (batch, seq, embed_dim)
    assert jnp.allclose(out_dma, ref, atol=1e-5, rtol=1e-5), "dma path mismatch"

    # Path 2: VMEM-resident table, one-hot MXU gather.
    out_oh = jax.block_until_ready(embeddings_forward(ids, table, mode="onehot"))
    assert out_oh.shape == (batch, seq, embed_dim)
    assert jnp.allclose(out_oh, ref, atol=1e-3, rtol=1e-3), "onehot path mismatch"

    # Auto mode (small vocab -> one-hot).
    out_auto = jax.block_until_ready(embeddings_forward(ids, table))
    assert jnp.allclose(out_auto, ref, atol=1e-3, rtol=1e-3), "auto path mismatch"

    # Ragged / non-aligned case: embed_dim not a multiple of 128, token count
    # not a multiple of the tile (exercises feature padding + tail padding).
    vocab2, d2, b2, s2 = 50, 32, 3, 5
    table2 = jax.random.normal(k_tab2, (vocab2, d2), dtype=jnp.float32)
    ids2 = jax.random.randint(k_ids2, (b2, s2), 0, vocab2, dtype=jnp.int32)
    ref2 = jnp.take(table2, ids2, axis=0) * math.sqrt(d2)
    out2 = jax.block_until_ready(embeddings_forward(ids2, table2, mode="dma"))
    assert out2.shape == (b2, s2, d2)
    assert jnp.allclose(out2, ref2, atol=1e-5, rtol=1e-5), "ragged dma mismatch"

    # Init-time prepared table: padding + sqrt(d) hoisted out of the forward
    # path (kernel becomes a pure gather with scale==1.0).
    table2_prep, d2_logical, scale2 = prepare_embedding_table(table2, prescale=True)
    out2p = jax.block_until_ready(
        embeddings_forward(ids2, table2_prep, embed_dim=d2_logical,
                           scale=scale2, mode="dma"))
    assert out2p.shape == (b2, s2, d2)
    assert jnp.allclose(out2p, ref2, atol=1e-5, rtol=1e-5), "prepared-table mismatch"

    print("KERNEL_OK")
</pallas_src>

<mosaic_0001>
module attributes {stable_mosaic.version = 11 : i64} {
  func.func @_embed_gather_kernel(%arg0: i32, %arg1: memref<16xi32, #tpu.memory_space<smem>>, %arg2: memref<64x128xf32, #tpu.memory_space<any>>, %arg3: memref<16x128xf32, #tpu.memory_space<vmem>>, %arg4: memref<2x!tpu.dma_semaphore, #tpu.memory_space<semaphore_mem>>) attributes {dimension_semantics = [#tpu.dimension_semantics<parallel>], iteration_bounds = array<i64: 1>, scalar_prefetch = 1 : i64, scratch_operands = 1 : i64, tpu.core_type = #tpu.core_type<tc>, window_params = [{}, {transform_indices = @transform_1, window_bounds = array<i64: 16, 128>}]} {
    %c16_i32 = arith.constant 16 : i32
    %0 = arith.muli %arg0, %c16_i32 : i32
    %1 = tpu.assume_multiple %0, 16 : i32
    %c0_i32 = arith.constant 0 : i32
    %c0_i32_0 = arith.constant 0 : i32
    %c8_i32 = arith.constant 8 : i32
    %2 = arith.muli %c0_i32_0, %c8_i32 : i32
    %c0_i32_1 = arith.constant 0 : i32
    %3 = arith.addi %c0_i32_1, %2 : i32
    %c0_i32_2 = arith.constant 0 : i32
    %4 = arith.addi %3, %c0_i32_2 : i32
    %5 = arith.addi %1, %4 : i32
    %6 = arith.index_cast %5 : i32 to index
    %7 = memref.load %arg1[%6] : memref<16xi32, #tpu.memory_space<smem>>
    %c0_i32_3 = arith.constant 0 : i32
    %8 = tpu.memref_slice %arg2[%7, %c0_i32_3] : memref<64x128xf32, #tpu.memory_space<any>> -> memref<1x128xf32, #tpu.memory_space<any>>
    %c0_i32_4 = arith.constant 0 : i32
    %9 = tpu.memref_slice %arg3[%4, %c0_i32_4] : memref<16x128xf32, #tpu.memory_space<vmem>> -> memref<1x128xf32, #tpu.memory_space<vmem>>
    %10 = tpu.memref_slice %arg4[%c0_i32] : memref<2x!tpu.dma_semaphore, #tpu.memory_space<semaphore_mem>> -> memref<1x!tpu.dma_semaphore, #tpu.memory_space<semaphore_mem>>
    %11 = tpu.memref_squeeze %10 : memref<1x!tpu.dma_semaphore, #tpu.memory_space<semaphore_mem>> -> memref<!tpu.dma_semaphore, #tpu.memory_space<semaphore_mem>>
    tpu.enqueue_dma source(%8 : memref<1x128xf32, #tpu.memory_space<any>>) target(%9 : memref<1x128xf32, #tpu.memory_space<vmem>>) target_semaphore(%11 : memref<!tpu.dma_semaphore, #tpu.memory_space<semaphore_mem>>)
    %c1_i32 = arith.constant 1 : i32
    %12 = arith.addi %3, %c1_i32 : i32
    %13 = arith.addi %1, %12 : i32
    %14 = arith.index_cast %13 : i32 to index
    %15 = memref.load %arg1[%14] : memref<16xi32, #tpu.memory_space<smem>>
    %c0_i32_5 = arith.constant 0 : i32
    %16 = tpu.memref_slice %arg2[%15, %c0_i32_5] : memref<64x128xf32, #tpu.memory_space<any>> -> memref<1x128xf32, #tpu.memory_space<any>>
    %c0_i32_6 = arith.constant 0 : i32
    %17 = tpu.memref_slice %arg3[%12, %c0_i32_6] : memref<16x128xf32, #tpu.memory_space<vmem>> -> memref<1x128xf32, #tpu.memory_space<vmem>>
    %18 = tpu.memref_slice %arg4[%c0_i32] : memref<2x!tpu.dma_semaphore, #tpu.memory_space<semaphore_mem>> -> memref<1x!tpu.dma_semaphore, #tpu.memory_space<semaphore_mem>>
    %19 = tpu.memref_squeeze %18 : memref<1x!tpu.dma_semaphore, #tpu.memory_space<semaphore_mem>> -> memref<!tpu.dma_semaphore, #tpu.memory_space<semaphore_mem>>
    tpu.enqueue_dma source(%16 : memref<1x128xf32, #tpu.memory_space<any>>) target(%17 : memref<1x128xf32, #tpu.memory_space<vmem>>) target_semaphore(%19 : memref<!tpu.dma_semaphore, #tpu.memory_space<semaphore_mem>>)
    %c2_i32 = arith.constant 2 : i32
    %20 = arith.addi %3, %c2_i32 : i32
    %21 = arith.addi %1, %20 : i32
    %22 = arith.index_cast %21 : i32 to index
    %23 = memref.load %arg1[%22] : memref<16xi32, #tpu.memory_space<smem>>
    %c0_i32_7 = arith.constant 0 : i32
    %24 = tpu.memref_slice %arg2[%23, %c0_i32_7] : memref<64x128xf32, #tpu.memory_space<any>> -> memref<1x128xf32, #tpu.memory_space<any>>
    %c0_i32_8 = arith.constant 0 : i32
    %25 = tpu.memref_slice %arg3[%20, %c0_i32_8] : memref<16x128xf32, #tpu.memory_space<vmem>> -> memref<1x128xf32, #tpu.memory_space<vmem>>
    %26 = tpu.memref_slice %arg4[%c0_i32] : memref<2x!tpu.dma_semaphore, #tpu.memory_space<semaphore_mem>> -> memref<1x!tpu.dma_semaphore, #tpu.memory_space<semaphore_mem>>
    %27 = tpu.memref_squeeze %26 : memref<1x!tpu.dma_semaphore, #tpu.memory_space<semaphore_mem>> -> memref<!tpu.dma_semaphore, #tpu.memory_space<semaphore_mem>>
    tpu.enqueue_dma source(%24 : memref<1x128xf32, #tpu.memory_space<any>>) target(%25 : memref<1x128xf32, #tpu.memory_space<vmem>>) target_semaphore(%27 : memref<!tpu.dma_semaphore, #tpu.memory_space<semaphore_mem>>)
    %c3_i32 = arith.constant 3 : i32
    %28 = arith.addi %3, %c3_i32 : i32
    %29 = arith.addi %1, %28 : i32
    %30 = arith.index_cast %29 : i32 to index
    %31 = memref.load %arg1[%30] : memref<16xi32, #tpu.memory_space<smem>>
    %c0_i32_9 = arith.constant 0 : i32
    %32 = tpu.memref_slice %arg2[%31, %c0_i32_9] : memref<64x128xf32, #tpu.memory_space<any>> -> memref<1x128xf32, #tpu.memory_space<any>>
    %c0_i32_10 = arith.constant 0 : i32
    %33 = tpu.memref_slice %arg3[%28, %c0_i32_10] : memref<16x128xf32, #tpu.memory_space<vmem>> -> memref<1x128xf32, #tpu.memory_space<vmem>>
    %34 = tpu.memref_slice %arg4[%c0_i32] : memref<2x!tpu.dma_semaphore, #tpu.memory_space<semaphore_mem>> -> memref<1x!tpu.dma_semaphore, #tpu.memory_space<semaphore_mem>>
    %35 = tpu.memref_squeeze %34 : memref<1x!tpu.dma_semaphore, #tpu.memory_space<semaphore_mem>> -> memref<!tpu.dma_semaphore, #tpu.memory_space<semaphore_mem>>
    tpu.enqueue_dma source(%32 : memref<1x128xf32, #tpu.memory_space<any>>) target(%33 : memref<1x128xf32, #tpu.memory_space<vmem>>) target_semaphore(%35 : memref<!tpu.dma_semaphore, #tpu.memory_space<semaphore_mem>>)
    %c4_i32 = arith.constant 4 : i32
    %36 = arith.addi %3, %c4_i32 : i32
    %37 = arith.addi %1, %36 : i32
    %38 = arith.index_cast %37 : i32 to index
    %39 = memref.load %arg1[%38] : memref<16xi32, #tpu.memory_space<smem>>
    %c0_i32_11 = arith.constant 0 : i32
    %40 = tpu.memref_slice %arg2[%39, %c0_i32_11] : memref<64x128xf32, #tpu.memory_space<any>> -> memref<1x128xf32, #tpu.memory_space<any>>
    %c0_i32_12 = arith.constant 0 : i32
    %41 = tpu.memref_slice %arg3[%36, %c0_i32_12] : memref<16x128xf32, #tpu.memory_space<vmem>> -> memref<1x128xf32, #tpu.memory_space<vmem>>
    %42 = tpu.memref_slice %arg4[%c0_i32] : memref<2x!tpu.dma_semaphore, #tpu.memory_space<semaphore_mem>> -> memref<1x!tpu.dma_semaphore, #tpu.memory_space<semaphore_mem>>
    %43 = tpu.memref_squeeze %42 : memref<1x!tpu.dma_semaphore, #tpu.memory_space<semaphore_mem>> -> memref<!tpu.dma_semaphore, #tpu.memory_space<semaphore_mem>>
    tpu.enqueue_dma source(%40 : memref<1x128xf32, #tpu.memory_space<any>>) target(%41 : memref<1x128xf32, #tpu.memory_space<vmem>>) target_semaphore(%43 : memref<!tpu.dma_semaphore, #tpu.memory_space<semaphore_mem>>)
    %c5_i32 = arith.constant 5 : i32
    %44 = arith.addi %3, %c5_i32 : i32
    %45 = arith.addi %1, %44 : i32
    %46 = arith.index_cast %45 : i32 to index
    %47 = memref.load %arg1[%46] : memref<16xi32, #tpu.memory_space<smem>>
    %c0_i32_13 = arith.constant 0 : i32
    %48 = tpu.memref_slice %arg2[%47, %c0_i32_13] : memref<64x128xf32, #tpu.memory_space<any>> -> memref<1x128xf32, #tpu.memory_space<any>>
    %c0_i32_14 = arith.constant 0 : i32
    %49 = tpu.memref_slice %arg3[%44, %c0_i32_14] : memref<16x128xf32, #tpu.memory_space<vmem>> -> memref<1x128xf32, #tpu.memory_space<vmem>>
    %50 = tpu.memref_slice %arg4[%c0_i32] : memref<2x!tpu.dma_semaphore, #tpu.memory_space<semaphore_mem>> -> memref<1x!tpu.dma_semaphore, #tpu.memory_space<semaphore_mem>>
    %51 = tpu.memref_squeeze %50 : memref<1x!tpu.dma_semaphore, #tpu.memory_space<semaphore_mem>> -> memref<!tpu.dma_semaphore, #tpu.memory_space<semaphore_mem>>
    tpu.enqueue_dma source(%48 : memref<1x128xf32, #tpu.memory_space<any>>) target(%49 : memref<1x128xf32, #tpu.memory_space<vmem>>) target_semaphore(%51 : memref<!tpu.dma_semaphore, #tpu.memory_space<semaphore_mem>>)
    %c6_i32 = arith.constant 6 : i32
    %52 = arith.addi %3, %c6_i32 : i32
    %53 = arith.addi %1, %52 : i32
    %54 = arith.index_cast %53 : i32 to index
    %55 = memref.load %arg1[%54] : memref<16xi32, #tpu.memory_space<smem>>
    %c0_i32_15 = arith.constant 0 : i32
    %56 = tpu.memref_slice %arg2[%55, %c0_i32_15] : memref<64x128xf32, #tpu.memory_space<any>> -> memref<1x128xf32, #tpu.memory_space<any>>
    %c0_i32_16 = arith.constant 0 : i32
    %57 = tpu.memref_slice %arg3[%52, %c0_i32_16] : memref<16x128xf32, #tpu.memory_space<vmem>> -> memref<1x128xf32, #tpu.memory_space<vmem>>
    %58 = tpu.memref_slice %arg4[%c0_i32] : memref<2x!tpu.dma_semaphore, #tpu.memory_space<semaphore_mem>> -> memref<1x!tpu.dma_semaphore, #tpu.memory_space<semaphore_mem>>
    %59 = tpu.memref_squeeze %58 : memref<1x!tpu.dma_semaphore, #tpu.memory_space<semaphore_mem>> -> memref<!tpu.dma_semaphore, #tpu.memory_space<semaphore_mem>>
    tpu.enqueue_dma source(%56 : memref<1x128xf32, #tpu.memory_space<any>>) target(%57 : memref<1x128xf32, #tpu.memory_space<vmem>>) target_semaphore(%59 : memref<!tpu.dma_semaphore, #tpu.memory_space<semaphore_mem>>)
    %c7_i32 = arith.constant 7 : i32
    %60 = arith.addi %3, %c7_i32 : i32
    %61 = arith.addi %1, %60 : i32
    %62 = arith.index_cast %61 : i32 to index
    %63 = memref.load %arg1[%62] : memref<16xi32, #tpu.memory_space<smem>>
    %c0_i32_17 = arith.constant 0 : i32
    %64 = tpu.memref_slice %arg2[%63, %c0_i32_17] : memref<64x128xf32, #tpu.memory_space<any>> -> memref<1x128xf32, #tpu.memory_space<any>>
    %c0_i32_18 = arith.constant 0 : i32
    %65 = tpu.memref_slice %arg3[%60, %c0_i32_18] : memref<16x128xf32, #tpu.memory_space<vmem>> -> memref<1x128xf32, #tpu.memory_space<vmem>>
    %66 = tpu.memref_slice %arg4[%c0_i32] : memref<2x!tpu.dma_semaphore, #tpu.memory_space<semaphore_mem>> -> memref<1x!tpu.dma_semaphore, #tpu.memory_space<semaphore_mem>>
    %67 = tpu.memref_squeeze %66 : memref<1x!tpu.dma_semaphore, #tpu.memory_space<semaphore_mem>> -> memref<!tpu.dma_semaphore, #tpu.memory_space<semaphore_mem>>
    tpu.enqueue_dma source(%64 : memref<1x128xf32, #tpu.memory_space<any>>) target(%65 : memref<1x128xf32, #tpu.memory_space<vmem>>) target_semaphore(%67 : memref<!tpu.dma_semaphore, #tpu.memory_space<semaphore_mem>>)
    %c1_i32_19 = arith.constant 1 : i32
    %c1_i32_20 = arith.constant 1 : i32
    %c0_i32_21 = arith.constant 0 : i32
    %c8_i32_22 = arith.constant 8 : i32
    %68 = arith.muli %c0_i32_21, %c8_i32_22 : i32
    %c8_i32_23 = arith.constant 8 : i32
    %69 = arith.addi %c8_i32_23, %68 : i32
    %c0_i32_24 = arith.constant 0 : i32
    %70 = arith.addi %69, %c0_i32_24 : i32
    %71 = arith.addi %1, %70 : i32
    %72 = arith.index_cast %71 : i32 to index
    %73 = memref.load %arg1[%72] : memref<16xi32, #tpu.memory_space<smem>>
    %c0_i32_25 = arith.constant 0 : i32
    %74 = tpu.memref_slice %arg2[%73, %c0_i32_25] : memref<64x128xf32, #tpu.memory_space<any>> -> memref<1x128xf32, #tpu.memory_space<any>>
    %c0_i32_26 = arith.constant 0 : i32
    %75 = tpu.memref_slice %arg3[%70, %c0_i32_26] : memref<16x128xf32, #tpu.memory_space<vmem>> -> memref<1x128xf32, #tpu.memory_space<vmem>>
    %76 = tpu.memref_slice %arg4[%c1_i32_20] : memref<2x!tpu.dma_semaphore, #tpu.memory_space<semaphore_mem>> -> memref<1x!tpu.dma_semaphore, #tpu.memory_space<semaphore_mem>>
    %77 = tpu.memref_squeeze %76 : memref<1x!tpu.dma_semaphore, #tpu.memory_space<semaphore_mem>> -> memref<!tpu.dma_semaphore, #tpu.memory_space<semaphore_mem>>
    tpu.enqueue_dma source(%74 : memref<1x128xf32, #tpu.memory_space<any>>) target(%75 : memref<1x128xf32, #tpu.memory_space<vmem>>) target_semaphore(%77 : memref<!tpu.dma_semaphore, #tpu.memory_space<semaphore_mem>>)
    %c1_i32_27 = arith.constant 1 : i32
    %78 = arith.addi %69, %c1_i32_27 : i32
    %79 = arith.addi %1, %78 : i32
    %80 = arith.index_cast %79 : i32 to index
    %81 = memref.load %arg1[%80] : memref<16xi32, #tpu.memory_space<smem>>
    %c0_i32_28 = arith.constant 0 : i32
    %82 = tpu.memref_slice %arg2[%81, %c0_i32_28] : memref<64x128xf32, #tpu.memory_space<any>> -> memref<1x128xf32, #tpu.memory_space<any>>
    %c0_i32_29 = arith.constant 0 : i32
    %83 = tpu.memref_slice %arg3[%78, %c0_i32_29] : memref<16x128xf32, #tpu.memory_space<vmem>> -> memref<1x128xf32, #tpu.memory_space<vmem>>
    %84 = tpu.memref_slice %arg4[%c1_i32_20] : memref<2x!tpu.dma_semaphore, #tpu.memory_space<semaphore_mem>> -> memref<1x!tpu.dma_semaphore, #tpu.memory_space<semaphore_mem>>
    %85 = tpu.memref_squeeze %84 : memref<1x!tpu.dma_semaphore, #tpu.memory_space<semaphore_mem>> -> memref<!tpu.dma_semaphore, #tpu.memory_space<semaphore_mem>>
    tpu.enqueue_dma source(%82 : memref<1x128xf32, #tpu.memory_space<any>>) target(%83 : memref<1x128xf32, #tpu.memory_space<vmem>>) target_semaphore(%85 : memref<!tpu.dma_semaphore, #tpu.memory_space<semaphore_mem>>)
    %c2_i32_30 = arith.constant 2 : i32
    %86 = arith.addi %69, %c2_i32_30 : i32
    %87 = arith.addi %1, %86 : i32
    %88 = arith.index_cast %87 : i32 to index
    %89 = memref.load %arg1[%88] : memref<16xi32, #tpu.memory_space<smem>>
    %c0_i32_31 = arith.constant 0 : i32
    %90 = tpu.memref_slice %arg2[%89, %c0_i32_31] : memref<64x128xf32, #tpu.memory_space<any>> -> memref<1x128xf32, #tpu.memory_space<any>>
    %c0_i32_32 = arith.constant 0 : i32
    %91 = tpu.memref_slice %arg3[%86, %c0_i32_32] : memref<16x128xf32, #tpu.memory_space<vmem>> -> memref<1x128xf32, #tpu.memory_space<vmem>>
    %92 = tpu.memref_slice %arg4[%c1_i32_20] : memref<2x!tpu.dma_semaphore, #tpu.memory_space<semaphore_mem>> -> memref<1x!tpu.dma_semaphore, #tpu.memory_space<semaphore_mem>>
    %93 = tpu.memref_squeeze %92 : memref<1x!tpu.dma_semaphore, #tpu.memory_space<semaphore_mem>> -> memref<!tpu.dma_semaphore, #tpu.memory_space<semaphore_mem>>
    tpu.enqueue_dma source(%90 : memref<1x128xf32, #tpu.memory_space<any>>) target(%91 : memref<1x128xf32, #tpu.memory_space<vmem>>) target_semaphore(%93 : memref<!tpu.dma_semaphore, #tpu.memory_space<semaphore_mem>>)
    %c3_i32_33 = arith.constant 3 : i32
    %94 = arith.addi %69, %c3_i32_33 : i32
    %95 = arith.addi %1, %94 : i32
    %96 = arith.index_cast %95 : i32 to index
    %97 = memref.load %arg1[%96] : memref<16xi32, #tpu.memory_space<smem>>
    %c0_i32_34 = arith.constant 0 : i32
    %98 = tpu.memref_slice %arg2[%97, %c0_i32_34] : memref<64x128xf32, #tpu.memory_space<any>> -> memref<1x128xf32, #tpu.memory_space<any>>
    %c0_i32_35 = arith.constant 0 : i32
    %99 = tpu.memref_slice %arg3[%94, %c0_i32_35] : memref<16x128xf32, #tpu.memory_space<vmem>> -> memref<1x128xf32, #tpu.memory_space<vmem>>
    %100 = tpu.memref_slice %arg4[%c1_i32_20] : memref<2x!tpu.dma_semaphore, #tpu.memory_space<semaphore_mem>> -> memref<1x!tpu.dma_semaphore, #tpu.memory_space<semaphore_mem>>
    %101 = tpu.memref_squeeze %100 : memref<1x!tpu.dma_semaphore, #tpu.memory_space<semaphore_mem>> -> memref<!tpu.dma_semaphore, #tpu.memory_space<semaphore_mem>>
    tpu.enqueue_dma source(%98 : memref<1x128xf32, #tpu.memory_space<any>>) target(%99 : memref<1x128xf32, #tpu.memory_space<vmem>>) target_semaphore(%101 : memref<!tpu.dma_semaphore, #tpu.memory_space<semaphore_mem>>)
    %c4_i32_36 = arith.constant 4 : i32
    %102 = arith.addi %69, %c4_i32_36 : i32
    %103 = arith.addi %1, %102 : i32
    %104 = arith.index_cast %103 : i32 to index
    %105 = memref.load %arg1[%104] : memref<16xi32, #tpu.memory_space<smem>>
    %c0_i32_37 = arith.constant 0 : i32
    %106 = tpu.memref_slice %arg2[%105, %c0_i32_37] : memref<64x128xf32, #tpu.memory_space<any>> -> memref<1x128xf32, #tpu.memory_space<any>>
    %c0_i32_38 = arith.constant 0 : i32
    %107 = tpu.memref_slice %arg3[%102, %c0_i32_38] : memref<16x128xf32, #tpu.memory_space<vmem>> -> memref<1x128xf32, #tpu.memory_space<vmem>>
    %108 = tpu.memref_slice %arg4[%c1_i32_20] : memref<2x!tpu.dma_semaphore, #tpu.memory_space<semaphore_mem>> -> memref<1x!tpu.dma_semaphore, #tpu.memory_space<semaphore_mem>>
    %109 = tpu.memref_squeeze %108 : memref<1x!tpu.dma_semaphore, #tpu.memory_space<semaphore_mem>> -> memref<!tpu.dma_semaphore, #tpu.memory_space<semaphore_mem>>
    tpu.enqueue_dma source(%106 : memref<1x128xf32, #tpu.memory_space<any>>) target(%107 : memref<1x128xf32, #tpu.memory_space<vmem>>) target_semaphore(%109 : memref<!tpu.dma_semaphore, #tpu.memory_space<semaphore_mem>>)
    %c5_i32_39 = arith.constant 5 : i32
    %110 = arith.addi %69, %c5_i32_39 : i32
    %111 = arith.addi %1, %110 : i32
    %112 = arith.index_cast %111 : i32 to index
    %113 = memref.load %arg1[%112] : memref<16xi32, #tpu.memory_space<smem>>
    %c0_i32_40 = arith.constant 0 : i32
    %114 = tpu.memref_slice %arg2[%113, %c0_i32_40] : memref<64x128xf32, #tpu.memory_space<any>> -> memref<1x128xf32, #tpu.memory_space<any>>
    %c0_i32_41 = arith.constant 0 : i32
    %115 = tpu.memref_slice %arg3[%110, %c0_i32_41] : memref<16x128xf32, #tpu.memory_space<vmem>> -> memref<1x128xf32, #tpu.memory_space<vmem>>
    %116 = tpu.memref_slice %arg4[%c1_i32_20] : memref<2x!tpu.dma_semaphore, #tpu.memory_space<semaphore_mem>> -> memref<1x!tpu.dma_semaphore, #tpu.memory_space<semaphore_mem>>
    %117 = tpu.memref_squeeze %116 : memref<1x!tpu.dma_semaphore, #tpu.memory_space<semaphore_mem>> -> memref<!tpu.dma_semaphore, #tpu.memory_space<semaphore_mem>>
    tpu.enqueue_dma source(%114 : memref<1x128xf32, #tpu.memory_space<any>>) target(%115 : memref<1x128xf32, #tpu.memory_space<vmem>>) target_semaphore(%117 : memref<!tpu.dma_semaphore, #tpu.memory_space<semaphore_mem>>)
    %c6_i32_42 = arith.constant 6 : i32
    %118 = arith.addi %69, %c6_i32_42 : i32
    %119 = arith.addi %1, %118 : i32
    %120 = arith.index_cast %119 : i32 to index
    %121 = memref.load %arg1[%120] : memref<16xi32, #tpu.memory_space<smem>>
    %c0_i32_43 = arith.constant 0 : i32
    %122 = tpu.memref_slice %arg2[%121, %c0_i32_43] : memref<64x128xf32, #tpu.memory_space<any>> -> memref<1x128xf32, #tpu.memory_space<any>>
    %c0_i32_44 = arith.constant 0 : i32
    %123 = tpu.memref_slice %arg3[%118, %c0_i32_44] : memref<16x128xf32, #tpu.memory_space<vmem>> -> memref<1x128xf32, #tpu.memory_space<vmem>>
    %124 = tpu.memref_slice %arg4[%c1_i32_20] : memref<2x!tpu.dma_semaphore, #tpu.memory_space<semaphore_mem>> -> memref<1x!tpu.dma_semaphore, #tpu.memory_space<semaphore_mem>>
    %125 = tpu.memref_squeeze %124 : memref<1x!tpu.dma_semaphore, #tpu.memory_space<semaphore_mem>> -> memref<!tpu.dma_semaphore, #tpu.memory_space<semaphore_mem>>
    tpu.enqueue_dma source(%122 : memref<1x128xf32, #tpu.memory_space<any>>) target(%123 : memref<1x128xf32, #tpu.memory_space<vmem>>) target_semaphore(%125 : memref<!tpu.dma_semaphore, #tpu.memory_space<semaphore_mem>>)
    %c7_i32_45 = arith.constant 7 : i32
    %126 = arith.addi %69, %c7_i32_45 : i32
    %127 = arith.addi %1, %126 : i32
    %128 = arith.index_cast %127 : i32 to index
    %129 = memref.load %arg1[%128] : memref<16xi32, #tpu.memory_space<smem>>
    %c0_i32_46 = arith.constant 0 : i32
    %130 = tpu.memref_slice %arg2[%129, %c0_i32_46] : memref<64x128xf32, #tpu.memory_space<any>> -> memref<1x128xf32, #tpu.memory_space<any>>
    %c0_i32_47 = arith.constant 0 : i32
    %131 = tpu.memref_slice %arg3[%126, %c0_i32_47] : memref<16x128xf32, #tpu.memory_space<vmem>> -> memref<1x128xf32, #tpu.memory_space<vmem>>
    %132 = tpu.memref_slice %arg4[%c1_i32_20] : memref<2x!tpu.dma_semaphore, #tpu.memory_space<semaphore_mem>> -> memref<1x!tpu.dma_semaphore, #tpu.memory_space<semaphore_mem>>
    %133 = tpu.memref_squeeze %132 : memref<1x!tpu.dma_semaphore, #tpu.memory_space<semaphore_mem>> -> memref<!tpu.dma_semaphore, #tpu.memory_space<semaphore_mem>>
    tpu.enqueue_dma source(%130 : memref<1x128xf32, #tpu.memory_space<any>>) target(%131 : memref<1x128xf32, #tpu.memory_space<vmem>>) target_semaphore(%133 : memref<!tpu.dma_semaphore, #tpu.memory_space<semaphore_mem>>)
    %c1_i32_48 = arith.constant 1 : i32
    %c0_i32_49 = arith.constant 0 : i32
    %c0_i32_50 = arith.constant 0 : i32
    %c0_i32_51 = arith.constant 0 : i32
    %134 = tpu.memref_slice %arg3[%c0_i32_50, %c0_i32_51] : memref<16x128xf32, #tpu.memory_space<vmem>> -> memref<8x128xf32, #tpu.memory_space<vmem>>
    %c0_i32_52 = arith.constant 0 : i32
    %c0_i32_53 = arith.constant 0 : i32
    %135 = tpu.memref_slice %arg3[%c0_i32_52, %c0_i32_53] : memref<16x128xf32, #tpu.memory_space<vmem>> -> memref<8x128xf32, #tpu.memory_space<vmem>>
    %136 = tpu.memref_slice %arg4[%c0_i32_49] : memref<2x!tpu.dma_semaphore, #tpu.memory_space<semaphore_mem>> -> memref<1x!tpu.dma_semaphore, #tpu.memory_space<semaphore_mem>>
    %137 = tpu.memref_squeeze %136 : memref<1x!tpu.dma_semaphore, #tpu.memory_space<semaphore_mem>> -> memref<!tpu.dma_semaphore, #tpu.memory_space<semaphore_mem>>
    tpu.wait_dma2 semaphore(%137 : memref<!tpu.dma_semaphore, #tpu.memory_space<semaphore_mem>>) src(%134 : memref<8x128xf32, #tpu.memory_space<vmem>>) dst(%135 : memref<8x128xf32, #tpu.memory_space<vmem>>)
    %c0 = arith.constant 0 : index
    %c0_54 = arith.constant 0 : index
    %138 = vector.load %arg3[%c0, %c0_54] : memref<16x128xf32, #tpu.memory_space<vmem>>, vector<8x128xf32>
    %cst = arith.constant 11.3137083 : f32
    %139 = vector.broadcast %cst : f32 to vector<8x128xf32>
    %140 = arith.mulf %138, %139 : vector<8x128xf32>
    %c0_55 = arith.constant 0 : index
    %c0_56 = arith.constant 0 : index
    %141 = vector.load %arg3[%c0_55, %c0_56] : memref<16x128xf32, #tpu.memory_space<vmem>>, vector<8x128xf32>
    tpu.vector_store %arg3[%c0_55, %c0_56], %140 {strides = array<i32>} : memref<16x128xf32, #tpu.memory_space<vmem>>, vector<8x128xf32>,
    %c1_i32_57 = arith.constant 1 : i32
    %c8_i32_58 = arith.constant 8 : i32
    %c0_i32_59 = arith.constant 0 : i32
    %142 = tpu.memref_slice %arg3[%c8_i32_58, %c0_i32_59] : memref<16x128xf32, #tpu.memory_space<vmem>> -> memref<8x128xf32, #tpu.memory_space<vmem>>
    %c8_i32_60 = arith.constant 8 : i32
    %c0_i32_61 = arith.constant 0 : i32
    %143 = tpu.memref_slice %arg3[%c8_i32_60, %c0_i32_61] : memref<16x128xf32, #tpu.memory_space<vmem>> -> memref<8x128xf32, #tpu.memory_space<vmem>>
    %144 = tpu.memref_slice %arg4[%c1_i32_57] : memref<2x!tpu.dma_semaphore, #tpu.memory_space<semaphore_mem>> -> memref<1x!tpu.dma_semaphore, #tpu.memory_space<semaphore_mem>>
    %145 = tpu.memref_squeeze %144 : memref<1x!tpu.dma_semaphore, #tpu.memory_space<semaphore_mem>> -> memref<!tpu.dma_semaphore, #tpu.memory_space<semaphore_mem>>
    tpu.wait_dma2 semaphore(%145 : memref<!tpu.dma_semaphore, #tpu.memory_space<semaphore_mem>>) src(%142 : memref<8x128xf32, #tpu.memory_space<vmem>>) dst(%143 : memref<8x128xf32, #tpu.memory_space<vmem>>)
    %c8 = arith.constant 8 : index
    %c0_62 = arith.constant 0 : index
    %146 = vector.load %arg3[%c8, %c0_62] : memref<16x128xf32, #tpu.memory_space<vmem>>, vector<8x128xf32>
    %cst_63 = arith.constant 11.3137083 : f32
    %147 = vector.broadcast %cst_63 : f32 to vector<8x128xf32>
    %148 = arith.mulf %146, %147 : vector<8x128xf32>
    %c8_64 = arith.constant 8 : index
    %c0_65 = arith.constant 0 : index
    %149 = vector.load %arg3[%c8_64, %c0_65] : memref<16x128xf32, #tpu.memory_space<vmem>>, vector<8x128xf32>
    tpu.vector_store %arg3[%c8_64, %c0_65], %148 {strides = array<i32>} : memref<16x128xf32, #tpu.memory_space<vmem>>, vector<8x128xf32>,
    return
  }
  func.func @transform_1(%arg0: i32, %arg1: memref<16xi32, #tpu.memory_space<smem>>) -> (i32, i32) {
    %c0_i32 = arith.constant 0 : i32
    %c0_i32_0 = arith.constant 0 : i32
    return %arg0, %c0_i32 : i32, i32
  }
}

</mosaic_0001>

<llo_original>
// kernel: tpu_custom_call.1
$region0: #{tpu_custom_call.1}
  #allocation0 [shape = 'u32[]', space=smem, size = 0x4, offset = 0x4, fixed_abs, tag = 'smem constant byte address 0x4 - core index']
  #allocation1 [shape = 'u32[144,128]{1,0:T(1,128)}', space=vmem, size = 0x12000, scoped, tag = 'internal scratch']
  #allocation2 [shape = 's32[2]{0}', space=sflag, size = 0x8, scoped, tag = 'scratch operand']
  #allocation3 [shape = 's32[1]{0}', space=sflag, size = 0x4, scoped, tag = 'scoped memory for tpu_custom_call.1']
  #allocation4 [shape = 'u8[512]{0}', space=smem, size = 0x200, scoped, tag = 'prefetched SMEM operand 0']
  #allocation7 [shape = 's32[]', space=sflag, size = 0x4, offset = 0, fixed_abs, tag = 'sflag constant byte address 0x0 - dummy sync flag']
  #allocation8 [shape = 's32[]', space=sflag, size = 0x4, offset = 0, fixed_abs, tag = 'sflag constant byte address 0x0 - dummy sync flag']
  #allocation9 [shape = 'u32[]', space=smem, size = 0x4, offset = 0x44, fixed_abs, tag = 'smem constant byte address 0x44 - assertion arg 0']
  #allocation10 [shape = 'u32[]', space=smem, size = 0x4, offset = 0x48, fixed_abs, tag = 'smem constant byte address 0x48 - assertion arg 1']
  #allocation11 [shape = 's32[]', space=sflag, size = 0x4, offset = 0, fixed_abs, tag = 'sflag constant byte address 0x0 - dummy sync flag']
  #allocation12 [shape = 's32[]', space=sflag, size = 0x4, offset = 0, fixed_abs, tag = 'sflag constant byte address 0x0 - dummy sync flag']
  #allocation13 [shape = 's32[]', space=sflag, size = 0x4, offset = 0, fixed_abs, tag = 'sflag constant byte address 0x0 - dummy sync flag']
  #allocation14 [shape = 's32[]', space=sflag, size = 0x4, offset = 0, fixed_abs, tag = 'sflag constant byte address 0x0 - dummy sync flag']
  #allocation15 [shape = 's32[]', space=sflag, size = 0x4, offset = 0, fixed_abs, tag = 'sflag constant byte address 0x0 - dummy sync flag']
  #allocation16 [shape = 's32[]', space=sflag, size = 0x4, offset = 0, fixed_abs, tag = 'sflag constant byte address 0x0 - dummy sync flag']
  #allocation17 [shape = 's32[]', space=sflag, size = 0x4, offset = 0, fixed_abs, tag = 'sflag constant byte address 0x0 - dummy sync flag']
  #allocation18 [shape = 's32[]', space=sflag, size = 0x4, offset = 0, fixed_abs, tag = 'sflag constant byte address 0x0 - dummy sync flag']
  #allocation19 [shape = 's32[]', space=sflag, size = 0x4, offset = 0, fixed_abs, tag = 'sflag constant byte address 0x0 - dummy sync flag']
  #allocation20 [shape = 's32[]', space=sflag, size = 0x4, offset = 0, fixed_abs, tag = 'sflag constant byte address 0x0 - dummy sync flag']
  #allocation21 [shape = 's32[]', space=sflag, size = 0x4, offset = 0, fixed_abs, tag = 'sflag constant byte address 0x0 - dummy sync flag']
  #allocation22 [shape = 's32[]', space=sflag, size = 0x4, offset = 0, fixed_abs, tag = 'sflag constant byte address 0x0 - dummy sync flag']
  #allocation23 [shape = 's32[]', space=sflag, size = 0x4, offset = 0, fixed_abs, tag = 'sflag constant byte address 0x0 - dummy sync flag']
  #allocation24 [shape = 's32[]', space=sflag, size = 0x4, offset = 0, fixed_abs, tag = 'sflag constant byte address 0x0 - dummy sync flag']
  #allocation25 [shape = 's32[]', space=sflag, size = 0x4, offset = 0, fixed_abs, tag = 'sflag constant byte address 0x0 - dummy sync flag']
  #allocation26 [shape = 's32[]', space=sflag, size = 0x4, offset = 0, fixed_abs, tag = 'sflag constant byte address 0x0 - dummy sync flag']
  #allocation27 [shape = 's32[]', space=sflag, size = 0x4, offset = 0, fixed_abs, tag = 'sflag constant byte address 0x0 - dummy sync flag']
  #allocation28 [shape = 's32[]', space=sflag, size = 0x4, offset = 0, fixed_abs, tag = 'sflag constant byte address 0x0 - dummy sync flag']
  #allocation29 [shape = 's32[]', space=sflag, size = 0x4, offset = 0, fixed_abs, tag = 'sflag constant byte address 0x0 - dummy sync flag']
  #allocation30 [shape = 's32[]', space=sflag, size = 0x4, offset = 0, fixed_abs, tag = 'sflag constant byte address 0x0 - dummy sync flag']
  #allocation31 [shape = 's32[]', space=sflag, size = 0x4, offset = 0, fixed_abs, tag = 'sflag constant byte address 0x0 - dummy sync flag']
  #allocation32 [shape = 's32[]', space=sflag, size = 0x4, offset = 0, fixed_abs, tag = 'sflag constant byte address 0x0 - dummy sync flag']
  #allocation33 [shape = 's32[]', space=sflag, size = 0x4, offset = 0, fixed_abs, tag = 'sflag constant byte address 0x0 - dummy sync flag']
  #allocation34 [shape = 's32[]', space=sflag, size = 0x4, offset = 0, fixed_abs, tag = 'sflag constant byte address 0x0 - dummy sync flag']
  #allocation35 [shape = 's32[]', space=sflag, size = 0x4, offset = 0, fixed_abs, tag = 'sflag constant byte address 0x0 - dummy sync flag']
  #allocation36 [shape = 's32[]', space=sflag, size = 0x4, offset = 0, fixed_abs, tag = 'sflag constant byte address 0x0 - dummy sync flag']
  #allocation37 [shape = 's32[]', space=sflag, size = 0x4, offset = 0, fixed_abs, tag = 'sflag constant byte address 0x0 - dummy sync flag']
  #allocation38 [shape = 's32[]', space=sflag, size = 0x4, offset = 0, fixed_abs, tag = 'sflag constant byte address 0x0 - dummy sync flag']
  #allocation39 [shape = 's32[]', space=sflag, size = 0x4, offset = 0, fixed_abs, tag = 'sflag constant byte address 0x0 - dummy sync flag']
  #allocation40 [shape = 's32[]', space=sflag, size = 0x4, offset = 0, fixed_abs, tag = 'sflag constant byte address 0x0 - dummy sync flag']
  %s0 = inlined_call_operand.hbm [shape: s32[16], index: 0, kind: input, shape index: {}]
  %s1 = inlined_call_operand.hbm [shape: f32[64,128], index: 1, kind: input, shape index: {}]
  %s2 = inlined_call_operand.hbm [shape: f32[16,128], index: 2, kind: output, shape index: {}]
  %s3 = sld [smem:[#allocation0]]
  $region74: #{tpu_custom_call.1} parent=0
    _
  %s5 = ssub.s32 1, %s3
  %s6 = scalar_select 0, %s5, %s3
  %8 = dma.hbm_to_smem %s0, 16, [#allocation4], [#allocation3]
  %9 = dma.done [#allocation3], 16
  %10 = sfence
  $region1: #{tpu_custom_call.1} parent=0
    #allocation5 [shape = 'u8[8192]{0}', space=vmem, size = 0x2000, scoped, tag = 'output window, operand 0, single buffered']
    #allocation6 [shape = 's32[1]{0}', space=sflag, size = 0x4, scoped, tag = 'scoped memory for tpu_custom_call.1']
    %11 = vsyncpa [#allocation6], 0
    %s12 = smul.u32 0, 16
    %s13 = sld [smem:[#allocation4 + %s12]]
    %s14 = smul.addr %s13, 16
    %s15 = scalar_lea.hbm %s1, %s14
    // Predicated region
    $region2: #{tpu_custom_call.1} parent=1 // pred_check
      _
    $region3: #{tpu_custom_call.1} parent=1 // pred_check_branch
      %17 = sbr.rel target = $region5
    $region4: #{tpu_custom_call.1} parent=1 // pred_region
      %18 = sst [smem:[#allocation9]] [#allocation8]
      %19 = sst [smem:[#allocation10]] [#allocation7]
    $region5: #{tpu_custom_call.1} parent=1 // pred_fallthru
      _
    %21 = shalt.err (0)
    %s23 = sshll.u32 [#allocation5], 4
    %s24 = int_to_ptr.vmem [resolvable:$true] %s23
    %26 = dma.hbm_to_vmem [thread:$0]  %s15, 16, %s24, [#allocation2]
    %s27 = sadd.s32 %s12, 1
    %s28 = sld [smem:[#allocation4 + %s27]]
    %s29 = smul.addr %s28, 16
    %s30 = scalar_lea.hbm %s1, %s29
    %s31 = scalar_lea.vmem [#allocation5], 1
    // Predicated region
    $region6: #{tpu_custom_call.1} parent=1 // pred_check
      _
    $region7: #{tpu_custom_call.1} parent=1 // pred_check_branch
      %33 = sbr.rel target = $region9
    $region8: #{tpu_custom_call.1} parent=1 // pred_region
      %34 = sst [smem:[#allocation9]] [#allocation12]
      %35 = sst [smem:[#allocation10]] [#allocation11]
    $region9: #{tpu_custom_call.1} parent=1 // pred_fallthru
      _
    %37 = shalt.err (0)
    %s39 = sshll.u32 %s31, 4
    %s40 = int_to_ptr.vmem [resolvable:$true] %s39
    %42 = dma.hbm_to_vmem [thread:$0]  %s30, 16, %s40, [#allocation2]
    %s43 = sadd.s32 %s12, 2
    %s44 = sld [smem:[#allocation4 + %s43]]
    %s45 = smul.addr %s44, 16
    %s46 = scalar_lea.hbm %s1, %s45
    %s47 = scalar_lea.vmem [#allocation5], 2
    // Predicated region
    $region10: #{tpu_custom_call.1} parent=1 // pred_check
      _
    $region11: #{tpu_custom_call.1} parent=1 // pred_check_branch
      %49 = sbr.rel target = $region13
    $region12: #{tpu_custom_call.1} parent=1 // pred_region
      %50 = sst [smem:[#allocation9]] [#allocation14]
      %51 = sst [smem:[#allocation10]] [#allocation13]
    $region13: #{tpu_custom_call.1} parent=1 // pred_fallthru
      _
    %53 = shalt.err (0)
    %s55 = sshll.u32 %s47, 4
    %s56 = int_to_ptr.vmem [resolvable:$true] %s55
    %58 = dma.hbm_to_vmem [thread:$0]  %s46, 16, %s56, [#allocation2]
    %s59 = sadd.s32 %s12, 3
    %s60 = sld [smem:[#allocation4 + %s59]]
    %s61 = smul.addr %s60, 16
    %s62 = scalar_lea.hbm %s1, %s61
    %s63 = scalar_lea.vmem [#allocation5], 3
    // Predicated region
    $region14: #{tpu_custom_call.1} parent=1 // pred_check
      _
    $region15: #{tpu_custom_call.1} parent=1 // pred_check_branch
      %65 = sbr.rel target = $region17
    $region16: #{tpu_custom_call.1} parent=1 // pred_region
      %66 = sst [smem:[#allocation9]] [#allocation16]
      %67 = sst [smem:[#allocation10]] [#allocation15]
    $region17: #{tpu_custom_call.1} parent=1 // pred_fallthru
      _
    %69 = shalt.err (0)
    %s71 = sshll.u32 %s63, 4
    %s72 = int_to_ptr.vmem [resolvable:$true] %s71
    %74 = dma.hbm_to_vmem [thread:$0]  %s62, 16, %s72, [#allocation2]
    %s75 = sadd.s32 %s12, 4
    %s76 = sld [smem:[#allocation4 + %s75]]
    %s77 = smul.addr %s76, 16
    %s78 = scalar_lea.hbm %s1, %s77
    %s79 = scalar_lea.vmem [#allocation5], 4
    // Predicated region
    $region18: #{tpu_custom_call.1} parent=1 // pred_check
      _
    $region19: #{tpu_custom_call.1} parent=1 // pred_check_branch
      %81 = sbr.rel target = $region21
    $region20: #{tpu_custom_call.1} parent=1 // pred_region
      %82 = sst [smem:[#allocation9]] [#allocation18]
      %83 = sst [smem:[#allocation10]] [#allocation17]
    $region21: #{tpu_custom_call.1} parent=1 // pred_fallthru
      _
    %85 = shalt.err (0)
    %s87 = sshll.u32 %s79, 4
    %s88 = int_to_ptr.vmem [resolvable:$true] %s87
    %90 = dma.hbm_to_vmem [thread:$0]  %s78, 16, %s88, [#allocation2]
    %s91 = sadd.s32 %s12, 5
    %s92 = sld [smem:[#allocation4 + %s91]]
    %s93 = smul.addr %s92, 16
    %s94 = scalar_lea.hbm %s1, %s93
    %s95 = scalar_lea.vmem [#allocation5], 5
    // Predicated region
    $region22: #{tpu_custom_call.1} parent=1 // pred_check
      _
    $region23: #{tpu_custom_call.1} parent=1 // pred_check_branch
      %97 = sbr.rel target = $region25
    $region24: #{tpu_custom_call.1} parent=1 // pred_region
      %98 = sst [smem:[#allocation9]] [#allocation20]
      %99 = sst [smem:[#allocation10]] [#allocation19]
    $region25: #{tpu_custom_call.1} parent=1 // pred_fallthru
      _
    %101 = shalt.err (0)
    %s103 = sshll.u32 %s95, 4
    %s104 = int_to_ptr.vmem [resolvable:$true] %s103
    %106 = dma.hbm_to_vmem [thread:$0]  %s94, 16, %s104, [#allocation2]
    %s107 = sadd.s32 %s12, 6
    %s108 = sld [smem:[#allocation4 + %s107]]
    %s109 = smul.addr %s108, 16
    %s110 = scalar_lea.hbm %s1, %s109
    %s111 = scalar_lea.vmem [#allocation5], 6
    // Predicated region
    $region26: #{tpu_custom_call.1} parent=1 // pred_check
      _
    $region27: #{tpu_custom_call.1} parent=1 // pred_check_branch
      %113 = sbr.rel target = $region29
    $region28: #{tpu_custom_call.1} parent=1 // pred_region
      %114 = sst [smem:[#allocation9]] [#allocation22]
      %115 = sst [smem:[#allocation10]] [#allocation21]
    $region29: #{tpu_custom_call.1} parent=1 // pred_fallthru
      _
    %117 = shalt.err (0)
    %s119 = sshll.u32 %s111, 4
    %s120 = int_to_ptr.vmem [resolvable:$true] %s119
    %122 = dma.hbm_to_vmem [thread:$0]  %s110, 16, %s120, [#allocation2]
    %s123 = sadd.s32 %s12, 7
    %s124 = sld [smem:[#allocation4 + %s123]]
    %s125 = smul.addr %s124, 16
    %s126 = scalar_lea.hbm %s1, %s125
    %s127 = scalar_lea.vmem [#allocation5], 7
    // Predicated region
    $region30: #{tpu_custom_call.1} parent=1 // pred_check
      _
    $region31: #{tpu_custom_call.1} parent=1 // pred_check_branch
      %129 = sbr.rel target = $region33
    $region32: #{tpu_custom_call.1} parent=1 // pred_region
      %130 = sst [smem:[#allocation9]] [#allocation24]
      %131 = sst [smem:[#allocation10]] [#allocation23]
    $region33: #{tpu_custom_call.1} parent=1 // pred_fallthru
      _
    %133 = shalt.err (0)
    %s135 = sshll.u32 %s127, 4
    %s136 = int_to_ptr.vmem [resolvable:$true] %s135
    %138 = dma.hbm_to_vmem [thread:$0]  %s126, 16, %s136, [#allocation2]
    %s139 = sadd.s32 %s12, 8
    %s140 = sld [smem:[#allocation4 + %s139]]
    %s141 = smul.addr %s140, 16
    %s142 = scalar_lea.hbm %s1, %s141
    %s143 = scalar_lea.vmem [#allocation5], 8
    %s144 = scalar_lea.sflag [#allocation2], 1
    // Predicated region
    $region34: #{tpu_custom_call.1} parent=1 // pred_check
      _
    $region35: #{tpu_custom_call.1} parent=1 // pred_check_branch
      %146 = sbr.rel target = $region37
    $region36: #{tpu_custom_call.1} parent=1 // pred_region
      %147 = sst [smem:[#allocation9]] [#allocation26]
      %148 = sst [smem:[#allocation10]] [#allocation25]
    $region37: #{tpu_custom_call.1} parent=1 // pred_fallthru
      _
    %150 = shalt.err (0)
    %s152 = sshll.u32 %s143, 4
    %s153 = int_to_ptr.vmem [resolvable:$true] %s152
    %155 = dma.hbm_to_vmem [thread:$0]  %s142, 16, %s153, %s144
    %s156 = sadd.s32 %s12, 9
    %s157 = sld [smem:[#allocation4 + %s156]]
    %s158 = smul.addr %s157, 16
    %s159 = scalar_lea.hbm %s1, %s158
    %s160 = scalar_lea.vmem [#allocation5], 9
    // Predicated region
    $region38: #{tpu_custom_call.1} parent=1 // pred_check
      _
    $region39: #{tpu_custom_call.1} parent=1 // pred_check_branch
      %162 = sbr.rel target = $region41
    $region40: #{tpu_custom_call.1} parent=1 // pred_region
      %163 = sst [smem:[#allocation9]] [#allocation28]
      %164 = sst [smem:[#allocation10]] [#allocation27]
    $region41: #{tpu_custom_call.1} parent=1 // pred_fallthru
      _
    %166 = shalt.err (0)
    %s168 = sshll.u32 %s160, 4
    %s169 = int_to_ptr.vmem [resolvable:$true] %s168
    %171 = dma.hbm_to_vmem [thread:$0]  %s159, 16, %s169, %s144
    %s172 = sadd.s32 %s12, 10
    %s173 = sld [smem:[#allocation4 + %s172]]
    %s174 = smul.addr %s173, 16
    %s175 = scalar_lea.hbm %s1, %s174
    %s176 = scalar_lea.vmem [#allocation5], 10
    // Predicated region
    $region42: #{tpu_custom_call.1} parent=1 // pred_check
      _
    $region43: #{tpu_custom_call.1} parent=1 // pred_check_branch
      %178 = sbr.rel target = $region45
    $region44: #{tpu_custom_call.1} parent=1 // pred_region
      %179 = sst [smem:[#allocation9]] [#allocation30]
      %180 = sst [smem:[#allocation10]] [#allocation29]
    $region45: #{tpu_custom_call.1} parent=1 // pred_fallthru
      _
    %182 = shalt.err (0)
    %s184 = sshll.u32 %s176, 4
    %s185 = int_to_ptr.vmem [resolvable:$true] %s184
    %187 = dma.hbm_to_vmem [thread:$0]  %s175, 16, %s185, %s144
    %s188 = sadd.s32 %s12, 11
    %s189 = sld [smem:[#allocation4 + %s188]]
    %s190 = smul.addr %s189, 16
    %s191 = scalar_lea.hbm %s1, %s190
    %s192 = scalar_lea.vmem [#allocation5], 11
    // Predicated region
    $region46: #{tpu_custom_call.1} parent=1 // pred_check
      _
    $region47: #{tpu_custom_call.1} parent=1 // pred_check_branch
      %194 = sbr.rel target = $region49
    $region48: #{tpu_custom_call.1} parent=1 // pred_region
      %195 = sst [smem:[#allocation9]] [#allocation32]
      %196 = sst [smem:[#allocation10]] [#allocation31]
    $region49: #{tpu_custom_call.1} parent=1 // pred_fallthru
      _
    %198 = shalt.err (0)
    %s200 = sshll.u32 %s192, 4
    %s201 = int_to_ptr.vmem [resolvable:$true] %s200
    %203 = dma.hbm_to_vmem [thread:$0]  %s191, 16, %s201, %s144
    %s204 = sadd.s32 %s12, 12
    %s205 = sld [smem:[#allocation4 + %s204]]
    %s206 = smul.addr %s205, 16
    %s207 = scalar_lea.hbm %s1, %s206
    %s208 = scalar_lea.vmem [#allocation5], 12
    // Predicated region
    $region50: #{tpu_custom_call.1} parent=1 // pred_check
      _
    $region51: #{tpu_custom_call.1} parent=1 // pred_check_branch
      %210 = sbr.rel target = $region53
    $region52: #{tpu_custom_call.1} parent=1 // pred_region
      %211 = sst [smem:[#allocation9]] [#allocation34]
      %212 = sst [smem:[#allocation10]] [#allocation33]
    $region53: #{tpu_custom_call.1} parent=1 // pred_fallthru
      _
    %214 = shalt.err (0)
    %s216 = sshll.u32 %s208, 4
    %s217 = int_to_ptr.vmem [resolvable:$true] %s216
    %219 = dma.hbm_to_vmem [thread:$0]  %s207, 16, %s217, %s144
    %s220 = sadd.s32 %s12, 13
    %s221 = sld [smem:[#allocation4 + %s220]]
    %s222 = smul.addr %s221, 16
    %s223 = scalar_lea.hbm %s1, %s222
    %s224 = scalar_lea.vmem [#allocation5], 13
    // Predicated region
    $region54: #{tpu_custom_call.1} parent=1 // pred_check
      _
    $region55: #{tpu_custom_call.1} parent=1 // pred_check_branch
      %226 = sbr.rel target = $region57
    $region56: #{tpu_custom_call.1} parent=1 // pred_region
      %227 = sst [smem:[#allocation9]] [#allocation36]
      %228 = sst [smem:[#allocation10]] [#allocation35]
    $region57: #{tpu_custom_call.1} parent=1 // pred_fallthru
      _
    %230 = shalt.err (0)
    %s232 = sshll.u32 %s224, 4
    %s233 = int_to_ptr.vmem [resolvable:$true] %s232
    %235 = dma.hbm_to_vmem [thread:$0]  %s223, 16, %s233, %s144
    %s236 = sadd.s32 %s12, 14
    %s237 = sld [smem:[#allocation4 + %s236]]
    %s238 = smul.addr %s237, 16
    %s239 = scalar_lea.hbm %s1, %s238
    %s240 = scalar_lea.vmem [#allocation5], 14
    // Predicated region
    $region58: #{tpu_custom_call.1} parent=1 // pred_check
      _
    $region59: #{tpu_custom_call.1} parent=1 // pred_check_branch
      %242 = sbr.rel target = $region61
    $region60: #{tpu_custom_call.1} parent=1 // pred_region
      %243 = sst [smem:[#allocation9]] [#allocation38]
      %244 = sst [smem:[#allocation10]] [#allocation37]
    $region61: #{tpu_custom_call.1} parent=1 // pred_fallthru
      _
    %246 = shalt.err (0)
    %s248 = sshll.u32 %s240, 4
    %s249 = int_to_ptr.vmem [resolvable:$true] %s248
    %251 = dma.hbm_to_vmem [thread:$0]  %s239, 16, %s249, %s144
    %s252 = sadd.s32 %s12, 15
    %s253 = sld [smem:[#allocation4 + %s252]]
    %s254 = smul.addr %s253, 16
    %s255 = scalar_lea.hbm %s1, %s254
    %s256 = scalar_lea.vmem [#allocation5], 15
    // Predicated region
    $region62: #{tpu_custom_call.1} parent=1 // pred_check
      _
    $region63: #{tpu_custom_call.1} parent=1 // pred_check_branch
      %258 = sbr.rel target = $region65
    $region64: #{tpu_custom_call.1} parent=1 // pred_region
      %259 = sst [smem:[#allocation9]] [#allocation40]
      %260 = sst [smem:[#allocation10]] [#allocation39]
    $region65: #{tpu_custom_call.1} parent=1 // pred_fallthru
      _
    %262 = shalt.err (0)
    %s264 = sshll.u32 %s256, 4
    %s265 = int_to_ptr.vmem [resolvable:$true] %s264
    %267 = dma.hbm_to_vmem [thread:$0]  %s255, 16, %s265, %s144
    %s268 = smul.u32 8, 1
    %s269 = sshll.u32 %s268, 4
    %270 = dma.done [#allocation2], %s269
    %v271 = vld [vmem:[#allocation5] sm:$0xff]
    %v272 = vmul.f32 %v271, 11.313708
    %273 = vst [vmem:[#allocation5] sm:$0xff] %v272
    %s274 = sshll.u32 %s268, 4
    %275 = dma.done %s144, %s274
    %v276 = vld [vmem:[#allocation5 + $0x8] sm:$0xff]
    %v277 = vmul.f32 %v276, 11.313708
    %278 = vst [vmem:[#allocation5 + $0x8] sm:$0xff] %v277
    // Predicated region
    $region66: #{tpu_custom_call.1} parent=1 // pred_check
      _
    $region67: #{tpu_custom_call.1} parent=1 // pred_check_branch
      %280 = sbr.rel (0) target = $region69
    $region68: #{tpu_custom_call.1} parent=1 // pred_region
      %s282 = ssub.s32 256, 256
      %283 = vsyncadd [#allocation6], %s282
      %s284 = sshll.u32 [#allocation5], 4
      %s285 = int_to_ptr.vmem [resolvable:$true] %s284
      %290 = dma.vmem_to_hbm [thread:$0]  %s285, 256, %s2, [#allocation6], 128, 128, 8
    $region69: #{tpu_custom_call.1} parent=1 // pred_fallthru
      _
    // Predicated region
    $region70: #{tpu_custom_call.1} parent=1 // pred_check
      _
    $region71: #{tpu_custom_call.1} parent=1 // pred_check_branch
      %292 = sbr.rel (0) target = $region73
    $region72: #{tpu_custom_call.1} parent=1 // pred_region
      %293 = dma.done [#allocation6], 256
    $region73: #{tpu_custom_call.1} parent=1 // pred_fallthru
      _
    %294 = vsyncpa [#allocation6], 1
  %295 = vsyncmov [#allocation2]
  %s296 = vpop.sfrf %295
  %p297 = scmp.eq.s32.totalorder %s296, 0
  %p298 = pneg %p297
  %300 = shalt.err (%p298)
  %s301 = scalar_lea.sflag [#allocation2], 1
  %302 = vsyncmov %s301
  %s303 = vpop.sfrf %302
  %p304 = scmp.eq.s32.totalorder %s303, 0
  %p305 = pneg %p304
  %307 = shalt.err (%p305)

</llo_original>
